<compile_context>
chip_gen: v7x
topology: tpu7x:2x2x1
jax: 0.10.0
libtpu: 0.0.40
codegen_flags: <defaults>
</compile_context>

<pallas_src>
import functools

import jax
import jax.numpy as jnp
from jax.experimental import pallas as pl
from jax.experimental.pallas import tpu as pltpu


def _round_up(x: int, m: int) -> int:
    return ((x + m - 1) // m) * m


def _cdiv(a: int, b: int) -> int:
    return -(-a // b)


def _pad2(a, shape):
    pads = [(0, t - s) for s, t in zip(a.shape, shape)]
    if any(p for _, p in pads):
        a = jnp.pad(a, pads)
    return a


def mlp_kernel(x_ref, w1_ref, b1_ref, w2_ref, b2_ref, o_ref):
    # hidden = relu(x @ W1 + b1): MXU matmul (f32 accumulate) + VPU bias/relu.
    h = jnp.dot(x_ref[...], w1_ref[...], preferred_element_type=jnp.float32)
    h = jnp.maximum(h + b1_ref[...], 0.0)          # b1 is (1, H), broadcasts
    # out = hidden @ W2 + b2
    out = jnp.dot(h.astype(w2_ref.dtype), w2_ref[...],
                  preferred_element_type=jnp.float32)
    o_ref[...] = (out + b2_ref[...]).astype(o_ref.dtype)


def prepare_params(w1, b1, w2, b2, *, use_bf16=True, kn_align=128):
    """Pad + cast the Net parameters ONCE into the kernel's canonical layout.

    Weights are stored transposed vs. torch (W1: [F, H], W2: [H, O]) and
    zero-padded so every matmul dim is lane-aligned; biases stay f32.
    kn_align=128 suits v5e's 128x128 MXU and small nets; pass 256 for large
    n_feature/n_hidden on v6e/v7x (2x256x256 MXU).  Zero padding is exact:
    relu(0 + 0) = 0 contributes nothing to the second matmul.
    """
    n_feature, n_hidden = w1.shape
    n_output = w2.shape[1]
    f_pad = _round_up(n_feature, kn_align)
    h_pad = _round_up(n_hidden, kn_align)
    o_pad = _round_up(n_output, 128)
    dt = jnp.bfloat16 if use_bf16 else jnp.float32
    w1_p = _pad2(w1, (f_pad, h_pad)).astype(dt)
    w2_p = _pad2(w2, (h_pad, o_pad)).astype(dt)
    b1_p = _pad2(b1.reshape(1, -1), (1, h_pad)).astype(jnp.float32)
    b2_p = _pad2(b2.reshape(1, -1), (1, o_pad)).astype(jnp.float32)
    return w1_p, b1_p, w2_p, b2_p


@functools.partial(jax.jit,
                   static_argnames=("n_output", "block_batch", "out_dtype"))
def net_forward(x, w1_p, b1_p, w2_p, b2_p, *, n_output, block_batch=512,
                out_dtype=jnp.float32):
    """Fused Linear->ReLU->Linear forward as one batch-tiled Pallas kernel.

    Takes the pre-padded / pre-cast parameters from prepare_params().
    """
    batch, n_feature = x.shape
    f_pad, h_pad = w1_p.shape
    o_pad = w2_p.shape[1]
    in_dtype = w1_p.dtype
    assert w2_p.shape[0] == h_pad and n_feature <= f_pad
    assert b1_p.shape == (1, h_pad) and b2_p.shape == (1, o_pad)

    in_size = jnp.dtype(in_dtype).itemsize
    out_size = jnp.dtype(out_dtype).itemsize
    sub = 16 if in_size == 2 else 8            # sublane pack of matmul dtype

    # Rows: pad only up to the sublane pack (fused with the cast below).
    rows = _round_up(batch, sub)

    # Batch tile: clamp to the real (packed) batch, keep a multiple of pack.
    tb = min(_round_up(block_batch, sub), rows)
    # Give v7x's two TensorCores at least two grid steps when possible.
    if rows >= 2 * sub:
        tb = min(tb, _round_up(_cdiv(rows, 2), sub))

    # VMEM budget: v7x has 64 MiB/TC; keep the double-buffered footprint well
    # under that (also leaves headroom on v5e/v6e's 128 MiB).
    def footprint(t):
        return (2 * t * f_pad * in_size            # x blocks (double-buffered)
                + 2 * t * o_pad * out_size         # out blocks
                + t * h_pad * 4                    # f32 hidden temporaries
                + 2 * ((f_pad * h_pad + h_pad * o_pad) * in_size
                       + (h_pad + o_pad) * 4))     # resident weights + biases

    budget = 40 * 1024 * 1024
    while tb > sub and footprint(tb) > budget:
        tb = max(sub, _round_up(tb // 2, sub))
    # TODO(synk): if the padded weights alone exceed the VMEM budget, add a
    # K-tiled grid axis over f_pad/h_pad with an f32 accumulator scratch (and
    # pl.Buffered(1) / manual DMA for the resident operands) instead of
    # keeping both full weight matrices VMEM-resident.

    grid = (_cdiv(rows, tb),)                  # ragged last block is masked

    # Only wrapper-side touch of x: pad K (and rows to the pack) + cast, as a
    # single fused XLA op. Zero-padded K columns hit zero-padded W1 rows.
    x_p = x
    if (rows, f_pad) != (batch, n_feature):
        x_p = jnp.pad(x_p, ((0, rows - batch), (0, f_pad - n_feature)))
    if x_p.dtype != in_dtype:
        x_p = x_p.astype(in_dtype)

    # Cost estimate on real batch (advisory for XLA scheduling).
    flops = 2 * batch * (f_pad * h_pad + h_pad * o_pad)
    bytes_accessed = (batch * f_pad * in_size
                      + (f_pad * h_pad + h_pad * o_pad) * in_size
                      + (h_pad + o_pad) * 4
                      + batch * o_pad * out_size)

    out_p = pl.pallas_call(
        mlp_kernel,
        out_shape=jax.ShapeDtypeStruct((rows, o_pad), out_dtype),
        grid_spec=pltpu.PrefetchScalarGridSpec(
            num_scalar_prefetch=0,
            grid=grid,
            in_specs=[
                pl.BlockSpec((tb, f_pad), lambda i: (i, 0)),     # x: batch-tiled
                pl.BlockSpec((f_pad, h_pad), lambda i: (0, 0)),  # W1: VMEM-resident
                pl.BlockSpec((1, h_pad), lambda i: (0, 0)),      # b1: VMEM-resident
                pl.BlockSpec((h_pad, o_pad), lambda i: (0, 0)),  # W2: VMEM-resident
                pl.BlockSpec((1, o_pad), lambda i: (0, 0)),      # b2: VMEM-resident
            ],
            out_specs=pl.BlockSpec((tb, o_pad), lambda i: (i, 0)),
        ),
        compiler_params=pltpu.CompilerParams(
            dimension_semantics=("parallel",),   # megacore split on v7x
            vmem_limit_bytes=int(min(48 * 1024 * 1024,
                                     max(32 * 1024 * 1024,
                                         footprint(tb) + 4 * 1024 * 1024))),
        ),
        cost_estimate=pl.CostEstimate(
            flops=flops, transcendentals=0, bytes_accessed=bytes_accessed),
    )(x_p, w1_p, b1_p, w2_p, b2_p)

    # Slice real rows/columns back out (padding lanes are exact zeros).
    if rows == batch and o_pad == n_output:
        return out_p
    return out_p[:batch, :n_output]


def init_params(key, n_feature, n_hidden, n_output):
    """Deterministic init mimicking torch.nn.Linear (uniform(-1/sqrt(fan_in)))."""
    k1, k2, k3, k4 = jax.random.split(key, 4)
    bound1 = 1.0 / jnp.sqrt(n_feature)
    bound2 = 1.0 / jnp.sqrt(n_hidden)
    w1 = jax.random.uniform(k1, (n_feature, n_hidden), jnp.float32, -bound1, bound1)
    b1 = jax.random.uniform(k2, (1, n_hidden), jnp.float32, -bound1, bound1)
    w2 = jax.random.uniform(k3, (n_hidden, n_output), jnp.float32, -bound2, bound2)
    b2 = jax.random.uniform(k4, (1, n_output), jnp.float32, -bound2, bound2)
    return w1, b1, w2, b2


if __name__ == "__main__":
    n_feature, n_hidden, n_output = 16, 32, 4
    batch = 8

    key = jax.random.PRNGKey(0)
    kx, kp, kx2 = jax.random.split(key, 3)
    x = jax.random.normal(kx, (batch, n_feature), jnp.float32)
    w1, b1, w2, b2 = init_params(kp, n_feature, n_hidden, n_output)

    def ref_fn(xx):  # plain-JAX reference of the PyTorch Net forward
        return jnp.maximum(xx @ w1 + b1, 0.0) @ w2 + b2

    # f32-operand path: tight check of the kernel structure / padding.
    params_f32 = prepare_params(w1, b1, w2, b2, use_bf16=False)
    out_f32 = net_forward(x, *params_f32, n_output=n_output)
    jax.block_until_ready(out_f32)
    assert out_f32.shape == (batch, n_output)
    assert jnp.allclose(out_f32, ref_fn(x), atol=1e-4, rtol=1e-4)

    # bf16-operand path (v6e/v7x MXU rate); f32 accumulation keeps it close.
    params_bf16 = prepare_params(w1, b1, w2, b2, use_bf16=True)
    out_bf16 = net_forward(x, *params_bf16, n_output=n_output)
    jax.block_until_ready(out_bf16)
    assert out_bf16.shape == (batch, n_output)
    assert jnp.allclose(out_bf16, ref_fn(x), atol=2e-2, rtol=2e-2)

    # Ragged batch (grid of 2 steps, masked last block) + bf16 output stream.
    x2 = jax.random.normal(kx2, (40, n_feature), jnp.float32)
    out_rg = net_forward(x2, *params_bf16, n_output=n_output,
                         block_batch=32, out_dtype=jnp.bfloat16)
    jax.block_until_ready(out_rg)
    assert out_rg.shape == (40, n_output)
    assert jnp.allclose(out_rg.astype(jnp.float32), ref_fn(x2),
                        atol=5e-2, rtol=5e-2)

    print("KERNEL_OK")
</pallas_src>

<mosaic_0001>
module attributes {stable_mosaic.version = 11 : i64} {
  func.func @mlp_kernel(%arg0: i32, %arg1: memref<8x128xf32, #tpu.memory_space<vmem>>, %arg2: memref<128x128xf32, #tpu.memory_space<vmem>>, %arg3: memref<1x128xf32, #tpu.memory_space<vmem>>, %arg4: memref<128x128xf32, #tpu.memory_space<vmem>>, %arg5: memref<1x128xf32, #tpu.memory_space<vmem>>, %arg6: memref<8x128xf32, #tpu.memory_space<vmem>>) attributes {dimension_semantics = [#tpu.dimension_semantics<parallel>], iteration_bounds = array<i64: 1>, scalar_prefetch = 0 : i64, scratch_operands = 0 : i64, tpu.core_type = #tpu.core_type<tc>, window_params = [{transform_indices = @transform_0, window_bounds = array<i64: 8, 128>}, {pipeline_mode = #tpu.pipeline_mode<synchronous>, transform_indices = @transform_1, window_bounds = array<i64: 128, 128>}, {pipeline_mode = #tpu.pipeline_mode<synchronous>, transform_indices = @transform_2, window_bounds = array<i64: 1, 128>}, {pipeline_mode = #tpu.pipeline_mode<synchronous>, transform_indices = @transform_3, window_bounds = array<i64: 128, 128>}, {pipeline_mode = #tpu.pipeline_mode<synchronous>, transform_indices = @transform_4, window_bounds = array<i64: 1, 128>}, {transform_indices = @transform_5, window_bounds = array<i64: 8, 128>}]} {
    %c0 = arith.constant 0 : index
    %c0_0 = arith.constant 0 : index
    %0 = vector.load %arg1[%c0, %c0_0] : memref<8x128xf32, #tpu.memory_space<vmem>>, vector<8x128xf32>
    %c0_1 = arith.constant 0 : index
    %c0_2 = arith.constant 0 : index
    %1 = vector.load %arg2[%c0_1, %c0_2] : memref<128x128xf32, #tpu.memory_space<vmem>>, vector<128x128xf32>
    %cst = arith.constant dense<0.000000e+00> : vector<8x128xf32>
    %2 = tpu.matmul %0, %1, %cst {dimension_numbers = #tpu.dot_dimension_numbers<[1], [0], [0], [1], [0, 0, 1, 1], [], []>} : vector<8x128xf32>, vector<128x128xf32>, vector<8x128xf32> -> vector<8x128xf32>
    %c0_3 = arith.constant 0 : index
    %c0_4 = arith.constant 0 : index
    %3 = vector.load %arg3[%c0_3, %c0_4] : memref<1x128xf32, #tpu.memory_space<vmem>>, vector<1x128xf32>
    %4 = vector.broadcast %3 : vector<1x128xf32> to vector<8x128xf32>
    %5 = arith.addf %2, %4 : vector<8x128xf32>
    %cst_5 = arith.constant 0.000000e+00 : f32
    %6 = vector.broadcast %cst_5 : f32 to vector<8x128xf32>
    %7 = arith.maximumf %5, %6 : vector<8x128xf32>
    %c0_6 = arith.constant 0 : index
    %c0_7 = arith.constant 0 : index
    %8 = vector.load %arg4[%c0_6, %c0_7] : memref<128x128xf32, #tpu.memory_space<vmem>>, vector<128x128xf32>
    %cst_8 = arith.constant dense<0.000000e+00> : vector<8x128xf32>
    %9 = tpu.matmul %7, %8, %cst_8 {dimension_numbers = #tpu.dot_dimension_numbers<[1], [0], [0], [1], [0, 0, 1, 1], [], []>} : vector<8x128xf32>, vector<128x128xf32>, vector<8x128xf32> -> vector<8x128xf32>
    %c0_9 = arith.constant 0 : index
    %c0_10 = arith.constant 0 : index
    %10 = vector.load %arg5[%c0_9, %c0_10] : memref<1x128xf32, #tpu.memory_space<vmem>>, vector<1x128xf32>
    %11 = vector.broadcast %10 : vector<1x128xf32> to vector<8x128xf32>
    %12 = arith.addf %9, %11 : vector<8x128xf32>
    %c0_11 = arith.constant 0 : index
    %c0_12 = arith.constant 0 : index
    %13 = vector.load %arg6[%c0_11, %c0_12] : memref<8x128xf32, #tpu.memory_space<vmem>>, vector<8x128xf32>
    tpu.vector_store %arg6[%c0_11, %c0_12], %12 {strides = array<i32>} : memref<8x128xf32, #tpu.memory_space<vmem>>, vector<8x128xf32>,
    return
  }
  func.func @transform_0(%arg0: i32) -> (i32, i32) {
    %c0_i32 = arith.constant 0 : i32
    %c0_i32_0 = arith.constant 0 : i32
    return %arg0, %c0_i32 : i32, i32
  }
  func.func @transform_1(%arg0: i32) -> (i32, i32) {
    %c0_i32 = arith.constant 0 : i32
    %c0_i32_0 = arith.constant 0 : i32
    %c0_i32_1 = arith.constant 0 : i32
    return %c0_i32, %c0_i32_0 : i32, i32
  }
  func.func @transform_2(%arg0: i32) -> (i32, i32) {
    %c0_i32 = arith.constant 0 : i32
    %c0_i32_0 = arith.constant 0 : i32
    %c0_i32_1 = arith.constant 0 : i32
    return %c0_i32, %c0_i32_0 : i32, i32
  }
  func.func @transform_3(%arg0: i32) -> (i32, i32) {
    %c0_i32 = arith.constant 0 : i32
    %c0_i32_0 = arith.constant 0 : i32
    %c0_i32_1 = arith.constant 0 : i32
    return %c0_i32, %c0_i32_0 : i32, i32
  }
  func.func @transform_4(%arg0: i32) -> (i32, i32) {
    %c0_i32 = arith.constant 0 : i32
    %c0_i32_0 = arith.constant 0 : i32
    %c0_i32_1 = arith.constant 0 : i32
    return %c0_i32, %c0_i32_0 : i32, i32
  }
  func.func @transform_5(%arg0: i32) -> (i32, i32) {
    %c0_i32 = arith.constant 0 : i32
    %c0_i32_0 = arith.constant 0 : i32
    return %arg0, %c0_i32 : i32, i32
  }
}

</mosaic_0001>

<llo_original>
// kernel: net_forward.1
$region0: #{net_forward.1}
  #allocation0 [shape = 'u32[]', space=smem, size = 0x4, offset = 0x4, fixed_abs, tag = 'smem constant byte address 0x4 - core index']
  #allocation1 [shape = 'u32[144,128]{1,0:T(1,128)}', space=vmem, size = 0x12000, scoped, tag = 'internal scratch']
  %s0 = inlined_call_operand.vmem [shape: f32[8,128], index: 0, kind: input, shape index: {}]
  %s1 = inlined_call_operand.hbm [shape: f32[128,128], index: 1, kind: input, shape index: {}]
  %s2 = inlined_call_operand.vmem [shape: f32[1,128], index: 2, kind: input, shape index: {}]
  %s3 = inlined_call_operand.hbm [shape: f32[128,128], index: 3, kind: input, shape index: {}]
  %s4 = inlined_call_operand.vmem [shape: f32[1,128], index: 4, kind: input, shape index: {}]
  %s5 = inlined_call_operand.vmem [shape: f32[8,128], index: 5, kind: output, shape index: {}]
  %s6 = sld [smem:[#allocation0]]
  $region38: #{net_forward.1} parent=0
    _
  %s8 = ssub.s32 1, %s6
  %s9 = scalar_select 0, %s8, %s6
  $region1: #{net_forward.1} parent=0
    #allocation2 [shape = 'u8[65536]{0}', space=vmem, size = 0x10000, scoped, tag = 'input window, operand 1, single buffered']
    #allocation3 [shape = 's32[1]{0}', space=sflag, size = 0x4, scoped, tag = 'scoped memory for net_forward.1']
    #allocation4 [shape = 'u8[65536]{0}', space=vmem, size = 0x10000, scoped, tag = 'input window, operand 3, single buffered']
    #allocation5 [shape = 's32[1]{0}', space=sflag, size = 0x4, scoped, tag = 'scoped memory for net_forward.1']
    %10 = vsyncpa [#allocation3], 0
    %11 = vsyncpa [#allocation5], 0
    // Predicated region
    $region2: #{net_forward.1} parent=1 // pred_check
      _
    $region3: #{net_forward.1} parent=1 // pred_check_branch
      %13 = sbr.rel (0) target = $region5
    $region4: #{net_forward.1} parent=1 // pred_region
      _
    $region5: #{net_forward.1} parent=1 // pred_fallthru
      _
    // Predicated region
    $region6: #{net_forward.1} parent=1 // pred_check
      _
    $region7: #{net_forward.1} parent=1 // pred_check_branch
      %15 = sbr.rel (0) target = $region9
    $region8: #{net_forward.1} parent=1 // pred_region
      %s17 = ssub.s32 2048, 2048
      %18 = vsyncadd [#allocation3], %s17
      %s19 = sshll.u32 [#allocation2], 4
      %s20 = int_to_ptr.vmem [resolvable:$true] %s19
      %25 = dma.hbm_to_vmem [thread:$0]  %s1, 2048, %s20, [#allocation3], 128, 128, 8
    $region9: #{net_forward.1} parent=1 // pred_fallthru
      _
    // Predicated region
    $region10: #{net_forward.1} parent=1 // pred_check
      _
    $region11: #{net_forward.1} parent=1 // pred_check_branch
      %27 = sbr.rel (0) target = $region13
    $region12: #{net_forward.1} parent=1 // pred_region
      _
    $region13: #{net_forward.1} parent=1 // pred_fallthru
      _
    // Predicated region
    $region14: #{net_forward.1} parent=1 // pred_check
      _
    $region15: #{net_forward.1} parent=1 // pred_check_branch
      %29 = sbr.rel (0) target = $region17
    $region16: #{net_forward.1} parent=1 // pred_region
      %s31 = ssub.s32 2048, 2048
      %32 = vsyncadd [#allocation5], %s31
      %s33 = sshll.u32 [#allocation4], 4
      %s34 = int_to_ptr.vmem [resolvable:$true] %s33
      %39 = dma.hbm_to_vmem [thread:$0]  %s3, 2048, %s34, [#allocation5], 128, 128, 8
    $region17: #{net_forward.1} parent=1 // pred_fallthru
      _
    // Predicated region
    $region18: #{net_forward.1} parent=1 // pred_check
      _
    $region19: #{net_forward.1} parent=1 // pred_check_branch
      %41 = sbr.rel (0) target = $region21
    $region20: #{net_forward.1} parent=1 // pred_region
      _
    $region21: #{net_forward.1} parent=1 // pred_fallthru
      _
    // Predicated region
    $region22: #{net_forward.1} parent=1 // pred_check
      _
    $region23: #{net_forward.1} parent=1 // pred_check_branch
      %43 = sbr.rel (0) target = $region25
    $region24: #{net_forward.1} parent=1 // pred_region
      %44 = dma.done [#allocation3], 2048
    $region25: #{net_forward.1} parent=1 // pred_fallthru
      _
    // Predicated region
    $region26: #{net_forward.1} parent=1 // pred_check
      _
    $region27: #{net_forward.1} parent=1 // pred_check_branch
      %46 = sbr.rel (0) target = $region29
    $region28: #{net_forward.1} parent=1 // pred_region
      %47 = dma.done [#allocation5], 2048
    $region29: #{net_forward.1} parent=1 // pred_fallthru
      _
    %v48 = vld [vmem:[%s0] sm:$0xff]
    %v49 = vld [vmem:[#allocation2] sm:$0xff]
    %v50 = vld [vmem:[#allocation2 + $0x8] sm:$0xff]
    %v51 = vld [vmem:[#allocation2 + $0x10] sm:$0xff]
    %v52 = vld [vmem:[#allocation2 + $0x18] sm:$0xff]
    %v53 = vld [vmem:[#allocation2 + $0x20] sm:$0xff]
    %v54 = vld [vmem:[#allocation2 + $0x28] sm:$0xff]
    %v55 = vld [vmem:[#allocation2 + $0x30] sm:$0xff]
    %v56 = vld [vmem:[#allocation2 + $0x38] sm:$0xff]
    %v57 = vld [vmem:[#allocation2 + $0x40] sm:$0xff]
    %v58 = vld [vmem:[#allocation2 + $0x48] sm:$0xff]
    %v59 = vld [vmem:[#allocation2 + $0x50] sm:$0xff]
    %v60 = vld [vmem:[#allocation2 + $0x58] sm:$0xff]
    %v61 = vld [vmem:[#allocation2 + $0x60] sm:$0xff]
    %v62 = vld [vmem:[#allocation2 + $0x68] sm:$0xff]
    %v63 = vld [vmem:[#allocation2 + $0x70] sm:$0xff]
    %v64 = vld [vmem:[#allocation2 + $0x78] sm:$0xff]
    %v65 = vld [vmem:[%s2] sm:$0x1]
    %v67 = vlaneseq
    %v68 = vshrl.u32 %v67, 7
    %v69 = vsub.s32 0, %v68
    %v70 = vrot.slane %v65, %v69
    %72 = vmatprep.subr.mxu0 0.0
    %73 = vmatpush1.msra.mxu0 %v49
    %74 = vmatprep.subr.mxu0 0.0
    %75 = vmatpush1.msra.mxu0 %v50
    %76 = vmatprep.subr.mxu0 0.0
    %77 = vmatpush1.msra.mxu0 %v51
    %78 = vmatprep.subr.mxu0 0.0
    %79 = vmatpush1.msra.mxu0 %v52
    %80 = vmatprep.subr.mxu0 0.0
    %81 = vmatpush1.msra.mxu0 %v53
    %82 = vmatprep.subr.mxu0 0.0
    %83 = vmatpush1.msra.mxu0 %v54
    %84 = vmatprep.subr.mxu0 0.0
    %85 = vmatpush1.msra.mxu0 %v55
    %86 = vmatprep.subr.mxu0 0.0
    %87 = vmatpush1.msra.mxu0 %v56
    %88 = vmatprep.subr.mxu0 0.0
    %89 = vmatpush1.msra.mxu0 %v57
    %90 = vmatprep.subr.mxu0 0.0
    %91 = vmatpush1.msra.mxu0 %v58
    %92 = vmatprep.subr.mxu0 0.0
    %93 = vmatpush1.msra.mxu0 %v59
    %94 = vmatprep.subr.mxu0 0.0
    %95 = vmatpush1.msra.mxu0 %v60
    %96 = vmatprep.subr.mxu0 0.0
    %97 = vmatpush1.msra.mxu0 %v61
    %98 = vmatprep.subr.mxu0 0.0
    %99 = vmatpush1.msra.mxu0 %v62
    %100 = vmatprep.subr.mxu0 0.0
    %101 = vmatpush1.msra.mxu0 %v63
    %102 = vmatprep.subr.mxu0 0.0
    %103 = vmatpush1.msra.mxu0 %v64
    %104 = vmatprep.subr.mxu0 0.0
    %105 = vmatpush1.msra.mxu0 0.0
    %106 = vmatprep.subr.mxu0 0.0
    %107 = vmatpush1.msra.mxu0 0.0
    %108 = vmatprep.subr.mxu0 0.0
    %109 = vmatpush1.msra.mxu0 0.0
    %110 = vmatprep.subr.mxu0 0.0
    %111 = vmatpush1.msra.mxu0 0.0
    %112 = vmatprep.subr.mxu0 0.0
    %113 = vmatpush1.msra.mxu0 0.0
    %114 = vmatprep.subr.mxu0 0.0
    %115 = vmatpush1.msra.mxu0 0.0
    %116 = vmatprep.subr.mxu0 0.0
    %117 = vmatpush1.msra.mxu0 0.0
    %118 = vmatprep.subr.mxu0 0.0
    %119 = vmatpush1.msra.mxu0 0.0
    %120 = vmatprep.subr.mxu0 0.0
    %121 = vmatpush1.msra.mxu0 0.0
    %122 = vmatprep.subr.mxu0 0.0
    %123 = vmatpush1.msra.mxu0 0.0
    %124 = vmatprep.subr.mxu0 0.0
    %125 = vmatpush1.msra.mxu0 0.0
    %126 = vmatprep.subr.mxu0 0.0
    %127 = vmatpush1.msra.mxu0 0.0
    %128 = vmatprep.subr.mxu0 0.0
    %129 = vmatpush1.msra.mxu0 0.0
    %130 = vmatprep.subr.mxu0 0.0
    %131 = vmatpush1.msra.mxu0 0.0
    %132 = vmatprep.subr.mxu0 0.0
    %133 = vmatpush1.msra.mxu0 0.0
    %134 = vmatprep.subr.mxu0 0.0
    %135 = vmatpush1.msra.mxu0 0.0
    %136 = vmatprep.mubr.f32.mxu0 0.0
    %137 = vmatmul.mubr.f32.gmra.mrb[0].mxu0 %v48
    %v138 = vpop.f32.mrb[0].mxu0
    %v139 = vadd.f32 %v70, %v138
    %v140 = vpop.f32.mrb[0].mxu0
    %141 = vdwg.mxu0
    %v142 = vmax.f32 %v139, 0.0
    %v143 = vld [vmem:[#allocation4] sm:$0xff]
    %v144 = vld [vmem:[#allocation4 + $0x8] sm:$0xff]
    %v145 = vld [vmem:[#allocation4 + $0x10] sm:$0xff]
    %v146 = vld [vmem:[#allocation4 + $0x18] sm:$0xff]
    %v147 = vld [vmem:[#allocation4 + $0x20] sm:$0xff]
    %v148 = vld [vmem:[#allocation4 + $0x28] sm:$0xff]
    %v149 = vld [vmem:[#allocation4 + $0x30] sm:$0xff]
    %v150 = vld [vmem:[#allocation4 + $0x38] sm:$0xff]
    %v151 = vld [vmem:[#allocation4 + $0x40] sm:$0xff]
    %v152 = vld [vmem:[#allocation4 + $0x48] sm:$0xff]
    %v153 = vld [vmem:[#allocation4 + $0x50] sm:$0xff]
    %v154 = vld [vmem:[#allocation4 + $0x58] sm:$0xff]
    %v155 = vld [vmem:[#allocation4 + $0x60] sm:$0xff]
    %v156 = vld [vmem:[#allocation4 + $0x68] sm:$0xff]
    %v157 = vld [vmem:[#allocation4 + $0x70] sm:$0xff]
    %v158 = vld [vmem:[#allocation4 + $0x78] sm:$0xff]
    %v159 = vld [vmem:[%s4] sm:$0x1]
    %v161 = vlaneseq
    %v162 = vshrl.u32 %v161, 7
    %v163 = vsub.s32 0, %v162
    %v164 = vrot.slane %v159, %v163
    %166 = vmatprep.subr.mxu0 0.0
    %167 = vmatpush1.msra.mxu0 %v143
    %168 = vmatprep.subr.mxu0 0.0
    %169 = vmatpush1.msra.mxu0 %v144
    %170 = vmatprep.subr.mxu0 0.0
    %171 = vmatpush1.msra.mxu0 %v145
    %172 = vmatprep.subr.mxu0 0.0
    %173 = vmatpush1.msra.mxu0 %v146
    %174 = vmatprep.subr.mxu0 0.0
    %175 = vmatpush1.msra.mxu0 %v147
    %176 = vmatprep.subr.mxu0 0.0
    %177 = vmatpush1.msra.mxu0 %v148
    %178 = vmatprep.subr.mxu0 0.0
    %179 = vmatpush1.msra.mxu0 %v149
    %180 = vmatprep.subr.mxu0 0.0
    %181 = vmatpush1.msra.mxu0 %v150
    %182 = vmatprep.subr.mxu0 0.0
    %183 = vmatpush1.msra.mxu0 %v151
    %184 = vmatprep.subr.mxu0 0.0
    %185 = vmatpush1.msra.mxu0 %v152
    %186 = vmatprep.subr.mxu0 0.0
    %187 = vmatpush1.msra.mxu0 %v153
    %188 = vmatprep.subr.mxu0 0.0
    %189 = vmatpush1.msra.mxu0 %v154
    %190 = vmatprep.subr.mxu0 0.0
    %191 = vmatpush1.msra.mxu0 %v155
    %192 = vmatprep.subr.mxu0 0.0
    %193 = vmatpush1.msra.mxu0 %v156
    %194 = vmatprep.subr.mxu0 0.0
    %195 = vmatpush1.msra.mxu0 %v157
    %196 = vmatprep.subr.mxu0 0.0
    %197 = vmatpush1.msra.mxu0 %v158
    %198 = vmatprep.subr.mxu0 0.0
    %199 = vmatpush1.msra.mxu0 0.0
    %200 = vmatprep.subr.mxu0 0.0
    %201 = vmatpush1.msra.mxu0 0.0
    %202 = vmatprep.subr.mxu0 0.0
    %203 = vmatpush1.msra.mxu0 0.0
    %204 = vmatprep.subr.mxu0 0.0
    %205 = vmatpush1.msra.mxu0 0.0
    %206 = vmatprep.subr.mxu0 0.0
    %207 = vmatpush1.msra.mxu0 0.0
    %208 = vmatprep.subr.mxu0 0.0
    %209 = vmatpush1.msra.mxu0 0.0
    %210 = vmatprep.subr.mxu0 0.0
    %211 = vmatpush1.msra.mxu0 0.0
    %212 = vmatprep.subr.mxu0 0.0
    %213 = vmatpush1.msra.mxu0 0.0
    %214 = vmatprep.subr.mxu0 0.0
    %215 = vmatpush1.msra.mxu0 0.0
    %216 = vmatprep.subr.mxu0 0.0
    %217 = vmatpush1.msra.mxu0 0.0
    %218 = vmatprep.subr.mxu0 0.0
    %219 = vmatpush1.msra.mxu0 0.0
    %220 = vmatprep.subr.mxu0 0.0
    %221 = vmatpush1.msra.mxu0 0.0
    %222 = vmatprep.subr.mxu0 0.0
    %223 = vmatpush1.msra.mxu0 0.0
    %224 = vmatprep.subr.mxu0 0.0
    %225 = vmatpush1.msra.mxu0 0.0
    %226 = vmatprep.subr.mxu0 0.0
    %227 = vmatpush1.msra.mxu0 0.0
    %228 = vmatprep.subr.mxu0 0.0
    %229 = vmatpush1.msra.mxu0 0.0
    %230 = vmatprep.mubr.f32.mxu0 0.0
    %231 = vmatmul.mubr.f32.gmra.mrb[0].mxu0 %v142
    %v232 = vpop.f32.mrb[0].mxu0
    %v233 = vadd.f32 %v164, %v232
    %v234 = vpop.f32.mrb[0].mxu0
    %235 = vdwg.mxu0
    %236 = vst [vmem:[%s5] sm:$0xff] %v233
    // Predicated region
    $region30: #{net_forward.1} parent=1 // pred_check
      _
    $region31: #{net_forward.1} parent=1 // pred_check_branch
      %238 = sbr.rel (0) target = $region33
    $region32: #{net_forward.1} parent=1 // pred_region
      _
    $region33: #{net_forward.1} parent=1 // pred_fallthru
      _
    // Predicated region
    $region34: #{net_forward.1} parent=1 // pred_check
      _
    $region35: #{net_forward.1} parent=1 // pred_check_branch
      %240 = sbr.rel (0) target = $region37
    $region36: #{net_forward.1} parent=1 // pred_region
      _
    $region37: #{net_forward.1} parent=1 // pred_fallthru
      _
    %241 = vsyncpa [#allocation3], 1
    %242 = vsyncpa [#allocation5], 1

</llo_original>
